<compile_context>
chip_gen: v5e
topology: v5e:2x2
jax: 0.10.0
libtpu: 0.0.40
codegen_flags: <defaults>
</compile_context>

<pallas_src>
import numpy as np

import jax
import jax.numpy as jnp
from jax.experimental import pallas as pl
from jax.experimental.pallas import tpu as pltpu


# ----------------------------- Pallas kernels ------------------------------ #
def mlp_norm_kernel(x_ref, w1_ref, b1_ref, w2_ref, b2_ref, pred_ref, xn_ref):
    # x_ref : (tm, D) bf16     w1_ref: (D, H) bf16     b1_ref: (1, H) f32
    # w2_ref: (1, H)  bf16     b2_ref: (1, 1) f32 SMEM
    # pred_ref: (1, tm) f32 (lane-dense)    xn_ref: (tm, D) bf16 (normalized)
    x_bf = x_ref[...]

    # --- label_valuator MLP: Linear -> ReLU -> Linear ---
    h = jnp.dot(x_bf, w1_ref[...], preferred_element_type=jnp.float32) + b1_ref[...]
    h = jnp.maximum(h, 0.0)
    # Second Linear (H -> 1): contract over H with the (1, H) weight row so the
    # result lands directly as a lane-dense (1, tm) tile (no masked (tm, 1)
    # stores, no transpose of h).
    p = jax.lax.dot_general(
        w2_ref[...], h.astype(jnp.bfloat16),
        dimension_numbers=(((1,), (1,)), ((), ())),
        preferred_element_type=jnp.float32)                    # (1, tm)
    pred_ref[...] = p + b2_ref[0, 0]

    # --- cosine normalization, hoisted out of the Gram pass ---
    x_f32 = x_bf.astype(jnp.float32)
    inv_norm = jax.lax.rsqrt(
        jnp.maximum(jnp.sum(x_f32 * x_f32, axis=-1, keepdims=True), 1e-16))
    xn_ref[...] = (x_f32 * inv_norm).astype(jnp.bfloat16)


def gram_stats_kernel(xa_ref, cents_ref, xc_ref, sim_ref, means_ref):
    # xa_ref   : (A, D) bf16  pre-normalized anomaly rows      (resident)
    # cents_ref: (2, D) bf16  anomaly / normal centroid vectors (resident)
    # xc_ref   : (tn, D) bf16 pre-normalized column tile of xn
    # sim_ref  : (A, tn) f32  cosine similarities of anomaly rows vs this tile
    # means_ref: (2, tn) f32  [mean_ab; mean_no] for every node in this tile
    xc = xc_ref[...]
    sim_ref[...] = jax.lax.dot_general(
        xa_ref[...], xc,
        dimension_numbers=(((1,), (1,)), ((), ())),
        preferred_element_type=jnp.float32)
    means_ref[...] = jax.lax.dot_general(
        cents_ref[...], xc,
        dimension_numbers=(((1,), (1,)), ((), ())),
        preferred_element_type=jnp.float32)


# ------------------------------ kernel wrappers ----------------------------- #
def _tile(n, pref):
    """Pick a tile size <= pref, multiple of 128 (lane-dense, unmasked vst),
    and -- for mid/large n -- small enough that the grid has >= 2 steps so the
    single 'parallel' axis can shard across both v7x TensorCores."""
    if n <= 256:
        return n                              # one full block (always legal)
    t = min(pref, 128 * ((n + 255) // 256))   # ~ceil(n/2) rounded up to 128
    return max(128, t)


def rl_valu_pallas(feat_emb, w1, b1, w2, b2, *, row_tile=512):
    """Fused row pass: label_valuator MLP + row normalization.

    Returns (pred_score (N, 1) f32, xn (N, D) bf16 normalized embeddings),
    both device-resident.  feat_emb is read from HBM exactly once.
    """
    N, D = feat_emb.shape
    H = w1.shape[1]

    x_bf = feat_emb.astype(jnp.bfloat16)                 # cast once, halve DMA
    w1_bf = w1.astype(jnp.bfloat16)                      # (D, H), resident
    w2_bf = w2.reshape(1, H).astype(jnp.bfloat16)        # (1, H)
    b1 = b1.reshape(1, H).astype(jnp.float32)
    b2 = b2.reshape(1, 1).astype(jnp.float32)

    tm = _tile(N, row_tile)

    pred_1n, xn = pl.pallas_call(
        mlp_norm_kernel,
        grid=(pl.cdiv(N, tm),),
        in_specs=[
            pl.BlockSpec((tm, D), lambda i: (i, 0)),             # x row tile
            pl.BlockSpec((D, H), lambda i: (0, 0)),              # W1 (resident)
            pl.BlockSpec((1, H), lambda i: (0, 0)),              # b1
            pl.BlockSpec((1, H), lambda i: (0, 0)),              # W2 row
            pl.BlockSpec(memory_space=pltpu.MemorySpace.SMEM),   # b2 scalar
        ],
        out_specs=(
            pl.BlockSpec((1, tm), lambda i: (0, i)),             # pred (lane-dense)
            pl.BlockSpec((tm, D), lambda i: (i, 0)),             # normalized xn
        ),
        out_shape=(
            jax.ShapeDtypeStruct((1, N), jnp.float32),
            jax.ShapeDtypeStruct((N, D), jnp.bfloat16),
        ),
        compiler_params=pltpu.CompilerParams(
            dimension_semantics=("parallel",)),
    )(x_bf, w1_bf, b1, w2_bf, b2)

    pred_score = pred_1n.reshape(N, 1)                   # PyTorch layout (N, 1)
    return pred_score, xn


def rl_device_stats(xn, anomaly_list, norm_list, k, *, col_tile=1024):
    """Skinny Gram + fused mean reductions on the pre-normalized embeddings.

    Produces exactly what RL_Module consumes -- top-(k+1) neighbours of each
    anomaly node and each node's mean similarity to the anomaly / normal sets
    -- without ever materializing the N x N similarity matrix.
    """
    a_idx = jnp.asarray(anomaly_list, dtype=jnp.int32)
    n_idx = jnp.asarray(norm_list, dtype=jnp.int32)
    N, D = xn.shape
    A = int(a_idx.shape[0])

    xa = jnp.take(xn, a_idx, axis=0)                              # (A, D) bf16
    xno = jnp.take(xn, n_idx, axis=0)                             # (|Nn|, D)
    # mean_j cos(x, x_j) == x_hat . mean_j(x_hat_j)  (linearity of the mean)
    ca = jnp.mean(xa.astype(jnp.float32), axis=0)
    cn = jnp.mean(xno.astype(jnp.float32), axis=0)
    cents = jnp.stack([ca, cn], axis=0).astype(jnp.bfloat16)      # (2, D)

    tn = _tile(N, col_tile)

    sim_a, means = pl.pallas_call(
        gram_stats_kernel,
        grid=(pl.cdiv(N, tn),),
        in_specs=[
            pl.BlockSpec((A, D), lambda j: (0, 0)),               # anomaly rows (resident)
            pl.BlockSpec((2, D), lambda j: (0, 0)),               # centroids (resident)
            pl.BlockSpec((tn, D), lambda j: (j, 0)),              # xn column tile
        ],
        out_specs=(
            pl.BlockSpec((A, tn), lambda j: (0, j)),
            pl.BlockSpec((2, tn), lambda j: (0, j)),
        ),
        out_shape=(
            jax.ShapeDtypeStruct((A, N), jnp.float32),
            jax.ShapeDtypeStruct((2, N), jnp.float32),
        ),
        compiler_params=pltpu.CompilerParams(
            dimension_semantics=("parallel",)),
    )(xa, cents, xn)

    topk_sims, topk_idx = jax.lax.top_k(sim_a, k + 1)             # (A, k+1)
    return topk_sims, topk_idx, means[0], means[1]


# ------------------------ host-side RL bookkeeping -------------------------- #
# TODO(synk): the sequential, data-dependent RL episode loop (per-node
# threshold updates, reward bookkeeping, Python-list mask construction) has no
# clean Pallas equivalent and stays on the host, exactly as in the original
# module (it operates on Python lists / scalars).
def rl_module_host(anomaly_list, norm_list, topk_sims, topk_idx,
                   mean_ab, mean_no, thresholds, args):
    simi_score_list, nearest_nodes_list, rewards_log = [], [], []
    stop_flag = True
    k = args.hidden_k
    thresholds = list(thresholds)
    for i, node in enumerate(anomaly_list):
        # drop index 0: the query node itself (self-similarity ~1), matching
        # the original find_k_nearest_nodes usage.
        similarities_near = topk_sims[i, 1:]
        nearest_nodes = topk_idx[i, 1:]
        nearest_nodes_list.append([int(v) for v in nearest_nodes])
        simi_score_list.append([float(v) for v in similarities_near])
        std_mean_ab = float(mean_ab[node])
        std_mean_no = float(mean_no[node])
        reward_list = []
        for _ in range(args.episodes):
            reward = 0
            for j in range(len(nearest_nodes)):
                if similarities_near[j] >= thresholds[i]:
                    if float(mean_ab[nearest_nodes[j]]) >= std_mean_ab:
                        reward += 1
                else:
                    if float(mean_no[nearest_nodes[j]]) <= std_mean_no:
                        reward += 1
            if reward >= 0.5 * k:
                thresholds[i] = thresholds[i] - args.step_size
            else:
                thresholds[i] = thresholds[i] + args.step_size
            reward_list.append(reward)
        rewards_log.append(reward_list)
    new_thresholds = [0.999 if t >= 1.0 else t for t in thresholds]
    new_thresholds = [0.001 if t <= 0.0 else t for t in new_thresholds]
    return nearest_nodes_list, simi_score_list, rewards_log, new_thresholds, stop_flag


# ------------------------------ module wrapper ------------------------------ #
class Args:
    hidden_k = 4
    episodes = 2
    step_size = 0.05
    ini_th = 0.5


class RLValuPallas:
    def __init__(self, feature_dim, embed_dim, ano_count, args, key):
        self.embed_dim = embed_dim
        self.feat_dim = feature_dim
        self.step_size = args.step_size
        self.RL = True
        self.thresholds = [args.ini_th for _ in range(ano_count)]
        self.thresholds_log = [self.thresholds]
        # deterministic synthetic parameters for the label_valuator MLP.
        # w1 is stored (in, out) so the kernel computes x @ w1 (== x @ W1.T for
        # PyTorch's (out, in) storage); w2 keeps PyTorch's (out=1, in=H) layout.
        k1, k2 = jax.random.split(key)
        H = 8 * embed_dim
        self.w1 = jax.random.normal(k1, (embed_dim, H), jnp.float32) * (1.0 / np.sqrt(embed_dim))
        self.b1 = jnp.zeros((1, H), jnp.float32)
        self.w2 = jax.random.normal(k2, (1, H), jnp.float32) * (1.0 / np.sqrt(H))
        self.b2 = jnp.zeros((1, 1), jnp.float32)

    def forward(self, feat_emb, nodes_batch, labels_batch, anomaly_list,
                norm_list, args, train_flag=True):
        # Fused row pass: MLP prediction + normalized embeddings (one HBM read).
        pred_score, xn = rl_valu_pallas(feat_emb, self.w1, self.b1,
                                        self.w2, self.b2)

        mask_index_list = []
        if self.RL and train_flag:
            k = args.hidden_k
            topk_sims, topk_idx, mean_ab, mean_no = rl_device_stats(
                xn, anomaly_list, norm_list, k)
            # Only O(|anomaly| * k + N) values cross device -> host.
            topk_sims = np.asarray(jax.block_until_ready(topk_sims))
            topk_idx = np.asarray(topk_idx)
            mean_ab = np.asarray(mean_ab)
            mean_no = np.asarray(mean_no)

            (nearest_nodes, simi_score, rewards, thresholds,
             stop_flag) = rl_module_host(anomaly_list, norm_list, topk_sims,
                                         topk_idx, mean_ab, mean_no,
                                         self.thresholds, args)
            self.thresholds = thresholds
            self.RL = stop_flag
            self.thresholds_log.append(self.thresholds)
            for i in range(len(self.thresholds)):
                mask_index = []
                nei_index = np.where(
                    np.asarray(simi_score[i]) > self.thresholds[i])[0].tolist()
                for j in nei_index:
                    mask_index.append(nearest_nodes[i][j])
                mask_index_list.append(mask_index)
        return mask_index_list, self.thresholds, pred_score


# ---------------------------------- main ------------------------------------ #
if __name__ == "__main__":
    key = jax.random.PRNGKey(0)
    k_emb, k_params = jax.random.split(key)

    N, EMBED_DIM, FEATURE_DIM = 16, 32, 32
    args = Args()

    feat_emb = jax.random.normal(k_emb, (N, EMBED_DIM), jnp.float32)
    anomaly_list = [0, 3, 7]
    norm_list = [1, 2, 4, 5, 6, 8]
    nodes_batch = list(range(N))
    labels_batch = [0] * N

    model = RLValuPallas(FEATURE_DIM, EMBED_DIM, ano_count=len(anomaly_list),
                         args=args, key=k_params)

    mask_index_list, thresholds, pred_score = model.forward(
        feat_emb, nodes_batch, labels_batch, anomaly_list, norm_list, args,
        train_flag=True)
    pred_score = jax.block_until_ready(pred_score)

    # ---- sanity checks against plain-JAX references ----
    # MLP reference with the same bf16-input / f32-accumulate recipe.
    x_bf = feat_emb.astype(jnp.bfloat16)
    h_ref = jnp.maximum(
        jnp.dot(x_bf, model.w1.astype(jnp.bfloat16),
                preferred_element_type=jnp.float32) + model.b1, 0.0)
    pred_ref = jnp.dot(h_ref.astype(jnp.bfloat16),
                       model.w2.astype(jnp.bfloat16).T,
                       preferred_element_type=jnp.float32) + model.b2
    assert pred_score.shape == (N, 1)
    assert jnp.allclose(pred_score, pred_ref, atol=1e-2, rtol=1e-2)

    # Normalized embeddings + fused stats vs f32 references (bf16 -> loose tol).
    _, xn = rl_valu_pallas(feat_emb, model.w1, model.b1, model.w2, model.b2)
    xn = jax.block_until_ready(xn)
    xn_ref = feat_emb / jnp.maximum(
        jnp.linalg.norm(feat_emb, axis=1, keepdims=True), 1e-8)
    assert jnp.allclose(xn.astype(jnp.float32), xn_ref, atol=2e-2)

    topk_sims, topk_idx, mean_ab, mean_no = rl_device_stats(
        xn, anomaly_list, norm_list, args.hidden_k)
    topk_sims = jax.block_until_ready(topk_sims)
    sim_ref = xn_ref @ xn_ref.T
    a = jnp.asarray(anomaly_list)
    n = jnp.asarray(norm_list)
    assert jnp.allclose(mean_ab, sim_ref[:, a].mean(axis=1), atol=3e-2)
    assert jnp.allclose(mean_no, sim_ref[:, n].mean(axis=1), atol=3e-2)
    topk_ref, _ = jax.lax.top_k(sim_ref[a, :], args.hidden_k + 1)
    assert jnp.allclose(topk_sims, topk_ref, atol=3e-2)

    assert len(mask_index_list) == len(anomaly_list)
    assert len(thresholds) == len(anomaly_list)

    print("KERNEL_OK")
</pallas_src>

<mosaic_0001>
module attributes {stable_mosaic.version = 11 : i64} {
  func.func @mlp_norm_kernel(%arg0: i32, %arg1: memref<16x32xbf16, #tpu.memory_space<vmem>>, %arg2: memref<32x256xbf16, #tpu.memory_space<vmem>>, %arg3: memref<1x256xf32, #tpu.memory_space<vmem>>, %arg4: memref<1x256xbf16, #tpu.memory_space<vmem>>, %arg5: memref<1x1xf32, #tpu.memory_space<smem>>, %arg6: memref<1x16xf32, #tpu.memory_space<vmem>>, %arg7: memref<16x32xbf16, #tpu.memory_space<vmem>>) attributes {dimension_semantics = [#tpu.dimension_semantics<parallel>], iteration_bounds = array<i64: 1>, scalar_prefetch = 0 : i64, scratch_operands = 0 : i64, tpu.core_type = #tpu.core_type<tc>, window_params = [{transform_indices = @transform_0, window_bounds = array<i64: 16, 32>}, {pipeline_mode = #tpu.pipeline_mode<synchronous>, transform_indices = @transform_1, window_bounds = array<i64: 32, 256>}, {pipeline_mode = #tpu.pipeline_mode<synchronous>, transform_indices = @transform_2, window_bounds = array<i64: 1, 256>}, {pipeline_mode = #tpu.pipeline_mode<synchronous>, transform_indices = @transform_3, window_bounds = array<i64: 1, 256>}, {transform_indices = @transform_4, window_bounds = array<i64: 1, 1>}, {transform_indices = @transform_5, window_bounds = array<i64: 1, 16>}, {transform_indices = @transform_6, window_bounds = array<i64: 16, 32>}]} {
    %c0 = arith.constant 0 : index
    %c0_0 = arith.constant 0 : index
    %0 = vector.load %arg1[%c0, %c0_0] : memref<16x32xbf16, #tpu.memory_space<vmem>>, vector<16x32xbf16>
    %c0_1 = arith.constant 0 : index
    %c0_2 = arith.constant 0 : index
    %1 = vector.load %arg2[%c0_1, %c0_2] : memref<32x256xbf16, #tpu.memory_space<vmem>>, vector<32x256xbf16>
    %cst = arith.constant dense<0.000000e+00> : vector<16x256xf32>
    %2 = tpu.matmul %0, %1, %cst {dimension_numbers = #tpu.dot_dimension_numbers<[1], [0], [0], [1], [0, 0, 1, 1], [], []>} : vector<16x32xbf16>, vector<32x256xbf16>, vector<16x256xf32> -> vector<16x256xf32>
    %c0_3 = arith.constant 0 : index
    %c0_4 = arith.constant 0 : index
    %3 = vector.load %arg3[%c0_3, %c0_4] : memref<1x256xf32, #tpu.memory_space<vmem>>, vector<1x256xf32>
    %4 = vector.broadcast %3 : vector<1x256xf32> to vector<16x256xf32>
    %5 = arith.addf %2, %4 : vector<16x256xf32>
    %cst_5 = arith.constant 0.000000e+00 : f32
    %6 = vector.broadcast %cst_5 : f32 to vector<16x256xf32>
    %7 = arith.maximumf %5, %6 : vector<16x256xf32>
    %c0_6 = arith.constant 0 : index
    %c0_7 = arith.constant 0 : index
    %8 = vector.load %arg4[%c0_6, %c0_7] : memref<1x256xbf16, #tpu.memory_space<vmem>>, vector<1x256xbf16>
    %9 = arith.truncf %7 : vector<16x256xf32> to vector<16x256xbf16>
    %cst_8 = arith.constant dense<0.000000e+00> : vector<1x16xf32>
    %10 = tpu.matmul %8, %9, %cst_8 {dimension_numbers = #tpu.dot_dimension_numbers<[1], [1], [0], [0], [0, 0, 1, 0], [], []>} : vector<1x256xbf16>, vector<16x256xbf16>, vector<1x16xf32> -> vector<1x16xf32>
    %c0_9 = arith.constant 0 : index
    %c0_10 = arith.constant 0 : index
    %11 = memref.load %arg5[%c0_9, %c0_10] : memref<1x1xf32, #tpu.memory_space<smem>>
    %12 = vector.broadcast %11 : f32 to vector<1x16xf32>
    %13 = arith.addf %10, %12 : vector<1x16xf32>
    %c0_11 = arith.constant 0 : index
    %c0_12 = arith.constant 0 : index
    %14 = vector.load %arg6[%c0_11, %c0_12] : memref<1x16xf32, #tpu.memory_space<vmem>>, vector<1x16xf32>
    tpu.vector_store %arg6[%c0_11, %c0_12], %13 {strides = array<i32>} : memref<1x16xf32, #tpu.memory_space<vmem>>, vector<1x16xf32>,
    %15 = arith.extf %0 : vector<16x32xbf16> to vector<16x32xf32>
    %16 = arith.mulf %15, %15 : vector<16x32xf32>
    %cst_13 = arith.constant dense<0.000000e+00> : vector<16xf32>
    %17 = vector.multi_reduction <add>, %16, %cst_13 [1] : vector<16x32xf32> to vector<16xf32>
    %18 = vector.shape_cast %17 : vector<16xf32> to vector<16x1xf32>
    %cst_14 = arith.constant 1.000000e-16 : f32
    %19 = vector.broadcast %cst_14 : f32 to vector<16x1xf32>
    %20 = arith.maximumf %18, %19 : vector<16x1xf32>
    %21 = math.rsqrt %20 : vector<16x1xf32>
    %22 = vector.broadcast %21 : vector<16x1xf32> to vector<16x32xf32>
    %23 = arith.mulf %15, %22 : vector<16x32xf32>
    %24 = arith.truncf %23 : vector<16x32xf32> to vector<16x32xbf16>
    %c0_15 = arith.constant 0 : index
    %c0_16 = arith.constant 0 : index
    %25 = vector.load %arg7[%c0_15, %c0_16] : memref<16x32xbf16, #tpu.memory_space<vmem>>, vector<16x32xbf16>
    tpu.vector_store %arg7[%c0_15, %c0_16], %24 {strides = array<i32>} : memref<16x32xbf16, #tpu.memory_space<vmem>>, vector<16x32xbf16>,
    return
  }
  func.func @transform_0(%arg0: i32) -> (i32, i32) {
    %c0_i32 = arith.constant 0 : i32
    %c0_i32_0 = arith.constant 0 : i32
    return %arg0, %c0_i32 : i32, i32
  }
  func.func @transform_1(%arg0: i32) -> (i32, i32) {
    %c0_i32 = arith.constant 0 : i32
    %c0_i32_0 = arith.constant 0 : i32
    %c0_i32_1 = arith.constant 0 : i32
    return %c0_i32, %c0_i32_0 : i32, i32
  }
  func.func @transform_2(%arg0: i32) -> (i32, i32) {
    %c0_i32 = arith.constant 0 : i32
    %c0_i32_0 = arith.constant 0 : i32
    %c0_i32_1 = arith.constant 0 : i32
    return %c0_i32, %c0_i32_0 : i32, i32
  }
  func.func @transform_3(%arg0: i32) -> (i32, i32) {
    %c0_i32 = arith.constant 0 : i32
    %c0_i32_0 = arith.constant 0 : i32
    %c0_i32_1 = arith.constant 0 : i32
    return %c0_i32, %c0_i32_0 : i32, i32
  }
  func.func @transform_4(%arg0: i32) -> (i32, i32) {
    %c0_i32 = arith.constant 0 : i32
    %c0_i32_0 = arith.constant 0 : i32
    %c0_i32_1 = arith.constant 0 : i32
    return %c0_i32, %c0_i32_0 : i32, i32
  }
  func.func @transform_5(%arg0: i32) -> (i32, i32) {
    %c0_i32 = arith.constant 0 : i32
    %c0_i32_0 = arith.constant 0 : i32
    return %c0_i32, %arg0 : i32, i32
  }
  func.func @transform_6(%arg0: i32) -> (i32, i32) {
    %c0_i32 = arith.constant 0 : i32
    %c0_i32_0 = arith.constant 0 : i32
    return %arg0, %c0_i32 : i32, i32
  }
}

</mosaic_0001>

<llo_original>
// kernel: tpu_custom_call.1
$region0: #{tpu_custom_call.1}
  #allocation0 [shape = 'u32[]', space=smem, size = 0x4, offset = 0x4, fixed_abs, tag = 'smem constant byte address 0x4 - core index']
  #allocation1 [shape = 'u32[72,128]{1,0:T(1,128)}', space=vmem, size = 0x9000, scoped, tag = 'internal scratch']
  #allocation2 [shape = 'f32[1,1]{1,0:T(1,128)S(6)}', space=smem, size = 0x200, scoped, tag = 'scoped memory for tpu_custom_call.1']
  %s0 = inlined_call_operand.hbm [shape: bf16[16,32], index: 0, kind: input, shape index: {}]
  %s1 = inlined_call_operand.hbm [shape: bf16[32,256], index: 1, kind: input, shape index: {}]
  %s2 = inlined_call_operand.vmem [shape: f32[1,256], index: 2, kind: input, shape index: {}]
  %s3 = inlined_call_operand.vmem [shape: bf16[1,256], index: 3, kind: input, shape index: {}]
  %s4 = inlined_call_operand.<no memory space> [shape: f32[1,1], index: 4, kind: input, shape index: {}]
  %s5 = inlined_call_operand.hbm [shape: f32[1,16], index: 5, kind: output, shape index: {0}]
  %s6 = inlined_call_operand.hbm [shape: bf16[16,32], index: 6, kind: output, shape index: {1}]
  %7 = xla_tuple %s5, %s6
  %s8 = sld [smem:[#allocation0]]
  $region46: #{tpu_custom_call.1} parent=0
    _
  %s10 = ssub.s32 1, %s8
  %s11 = scalar_select 0, %s10, %s8
  %12 = sst [smem:[#allocation2]] %s4
  $region1: #{tpu_custom_call.1} parent=0
    #allocation3 [shape = 'u8[4096]{0}', space=vmem, size = 0x1000, scoped, tag = 'input window, operand 0, single buffered']
    #allocation4 [shape = 's32[1]{0}', space=sflag, size = 0x4, scoped, tag = 'scoped memory for tpu_custom_call.1']
    #allocation5 [shape = 's32[1]{0}', space=sflag, size = 0x4, scoped, tag = 'scoped memory for tpu_custom_call.1']
    #allocation6 [shape = 'u8[16384]{0}', space=vmem, size = 0x4000, scoped, tag = 'input window, operand 1, single buffered']
    #allocation7 [shape = 's32[1]{0}', space=sflag, size = 0x4, scoped, tag = 'scoped memory for tpu_custom_call.1']
    #allocation8 [shape = 'u8[512]{0}', space=vmem, size = 0x400, scoped, tag = 'output window, operand 0, single buffered']
    #allocation9 [shape = 'u8[4096]{0}', space=vmem, size = 0x1000, scoped, tag = 'output window, operand 1, single buffered']
    #allocation10 [shape = 's32[1]{0}', space=sflag, size = 0x4, scoped, tag = 'scoped memory for tpu_custom_call.1']
    %13 = vsyncpa [#allocation4], 0
    %14 = vsyncpa [#allocation7], 0
    %15 = vsyncpa [#allocation5], 0
    %16 = vsyncpa [#allocation10], 0
    // Predicated region
    $region2: #{tpu_custom_call.1} parent=1 // pred_check
      _
    $region3: #{tpu_custom_call.1} parent=1 // pred_check_branch
      %18 = sbr.rel (0) target = $region5
    $region4: #{tpu_custom_call.1} parent=1 // pred_region
      %20 = vsyncadd [#allocation4], 0
      %s21 = sshll.u32 %s0, 4
      %s22 = int_to_ptr.hbm [resolvable:$true] %s21
      %s23 = sshll.u32 [#allocation3], 4
      %s24 = int_to_ptr.vmem [resolvable:$true] %s23
      %29 = dma.hbm_to_vmem [thread:$0]  %s22, 128, %s24, [#allocation4], 64, 64, 4
    $region5: #{tpu_custom_call.1} parent=1 // pred_fallthru
      _
    // Predicated region
    $region6: #{tpu_custom_call.1} parent=1 // pred_check
      _
    $region7: #{tpu_custom_call.1} parent=1 // pred_check_branch
      %31 = sbr.rel (0) target = $region9
    $region8: #{tpu_custom_call.1} parent=1 // pred_region
      %33 = vsyncadd [#allocation7], 0
      %s34 = sshll.u32 %s1, 4
      %s35 = int_to_ptr.hbm [resolvable:$true] %s34
      %s36 = sshll.u32 [#allocation6], 4
      %s37 = int_to_ptr.vmem [resolvable:$true] %s36
      %42 = dma.hbm_to_vmem [thread:$0]  %s35, 512, %s37, [#allocation7], 128, 128, 8
    $region9: #{tpu_custom_call.1} parent=1 // pred_fallthru
      _
    // Predicated region
    $region10: #{tpu_custom_call.1} parent=1 // pred_check
      _
    $region11: #{tpu_custom_call.1} parent=1 // pred_check_branch
      %44 = sbr.rel (0) target = $region13
    $region12: #{tpu_custom_call.1} parent=1 // pred_region
      _
    $region13: #{tpu_custom_call.1} parent=1 // pred_fallthru
      _
    // Predicated region
    $region14: #{tpu_custom_call.1} parent=1 // pred_check
      _
    $region15: #{tpu_custom_call.1} parent=1 // pred_check_branch
      %46 = sbr.rel (0) target = $region17
    $region16: #{tpu_custom_call.1} parent=1 // pred_region
      _
    $region17: #{tpu_custom_call.1} parent=1 // pred_fallthru
      _
    // Predicated region
    $region18: #{tpu_custom_call.1} parent=1 // pred_check
      _
    $region19: #{tpu_custom_call.1} parent=1 // pred_check_branch
      %48 = sbr.rel (0) target = $region21
    $region20: #{tpu_custom_call.1} parent=1 // pred_region
      _
    $region21: #{tpu_custom_call.1} parent=1 // pred_fallthru
      _
    // Predicated region
    $region22: #{tpu_custom_call.1} parent=1 // pred_check
      _
    $region23: #{tpu_custom_call.1} parent=1 // pred_check_branch
      %50 = sbr.rel (0) target = $region25
    $region24: #{tpu_custom_call.1} parent=1 // pred_region
      %52 = dma.done [#allocation4], 128
    $region25: #{tpu_custom_call.1} parent=1 // pred_fallthru
      _
    // Predicated region
    $region26: #{tpu_custom_call.1} parent=1 // pred_check
      _
    $region27: #{tpu_custom_call.1} parent=1 // pred_check_branch
      %54 = sbr.rel (0) target = $region29
    $region28: #{tpu_custom_call.1} parent=1 // pred_region
      %56 = dma.done [#allocation7], 512
    $region29: #{tpu_custom_call.1} parent=1 // pred_fallthru
      _
    %v58 = vld [vmem:[#allocation3] sm:$0xf]
    %v59 = vld [vmem:[#allocation3 + $0x4] sm:$0xf]
    %v60 = vld [vmem:[#allocation6] sm:$0xff]
    %v61 = vld [vmem:[#allocation6 + $0x8] sm:$0xff]
    %v62 = vld [vmem:[#allocation6 + $0x10] sm:$0xff]
    %v63 = vld [vmem:[#allocation6 + $0x18] sm:$0xff]
    %v64 = vld [vmem:[%s2] sm:$0x3]
    %v66 = vperm.slane %v64, 0
    %v67 = vperm.slane %v64, 1
    %v72 = vunpack.c.l.b16 %v58
    %v73 = vunpack.c.l.b16 %v59
    %v74 = vpack.c.b16 %v73, %v72
    %v79 = vunpack.c.l.b16 %v60
    %v80 = vunpack.c.h.b16 %v60
    %v81 = vunpack.c.l.b16 %v61
    %v82 = vunpack.c.h.b16 %v61
    %v83 = vunpack.c.l.b16 %v62
    %v84 = vunpack.c.h.b16 %v62
    %v85 = vunpack.c.l.b16 %v63
    %v86 = vunpack.c.h.b16 %v63
    %v87 = vpack.c.b16 %v81, %v79
    %v88 = vpack.c.b16 %v82, %v80
    %v89 = vpack.c.b16 %v85, %v83
    %v90 = vpack.c.b16 %v86, %v84
    %vm95 = vcmask 261120
    %v97 = vsel %vm95, %v74, 0
    %99 = vmatpush.bf16.msra.mxu0 0
    %100 = vmatpush.bf16.msra.mxu0 0
    %101 = vmatpush.bf16.msra.mxu0 0
    %102 = vmatpush.bf16.msra.mxu0 0
    %103 = vmatpush.bf16.msra.mxu0 0
    %104 = vmatpush.bf16.msra.mxu0 0
    %105 = vmatpush.bf16.msra.mxu0 %v89
    %106 = vmatpush.bf16.msra.mxu0 %v87
    %107 = vmatmul.bf16.gmra.mxu0 %v97
    %v108 = vpop.f32.mrf.mxu0
    %v109 = vadd.f32 %v66, %v108
    %v110 = vpop.f32.mrf.mxu0
    %v111 = vadd.f32 %v66, %v110
    %112 = vdwg.mxu0
    %113 = vmatpush.bf16.msra.mxu0 0
    %114 = vmatpush.bf16.msra.mxu0 0
    %115 = vmatpush.bf16.msra.mxu0 0
    %116 = vmatpush.bf16.msra.mxu0 0
    %117 = vmatpush.bf16.msra.mxu0 0
    %118 = vmatpush.bf16.msra.mxu0 0
    %119 = vmatpush.bf16.msra.mxu0 %v90
    %120 = vmatpush.bf16.msra.mxu0 %v88
    %121 = vmatmul.bf16.gmra.mxu0 %v97
    %v122 = vpop.f32.mrf.mxu0
    %v123 = vadd.f32 %v67, %v122
    %v124 = vpop.f32.mrf.mxu0
    %v125 = vadd.f32 %v67, %v124
    %126 = vdwg.mxu0
    %v127 = vmax.f32 %v109, 0.0
    %v128 = vmax.f32 %v123, 0.0
    %v129 = vmax.f32 %v111, 0.0
    %v130 = vmax.f32 %v125, 0.0
    %v131 = vld [vmem:[%s3] sm:$0x3]
    %v132 = vpack.c.bf16 %v129, %v127
    %v133 = vpack.c.bf16 %v130, %v128
    %s134 = sld [smem:[#allocation2]]
    %v135 = vstv %s134
    %137 = vst [vmem:[#allocation1] ss:$9 sm:$0xff] %v131
    %v138 = vld [vmem:[#allocation1] sm:$0xff]
    %v139 = vld [vmem:[#allocation1 + $0x9] sm:$0xff]
    %142 = vmatpush.bf16.xpose.msra.mxu0 0
    %143 = vmatpush.bf16.xpose.msra.mxu0 0
    %144 = vmatpush.bf16.xpose.msra.mxu0 0
    %145 = vmatpush.bf16.xpose.msra.mxu0 0
    %146 = vmatpush.bf16.xpose.msra.mxu0 0
    %147 = vmatpush.bf16.xpose.msra.mxu0 0
    %148 = vmatpush.bf16.xpose.msra.mxu0 0
    %149 = vmatpush.bf16.xpose.msra.mxu0 %v132
    %150 = vmatmul.bf16.gmra.mxu0 %v138
    %v151 = vpop.f32.mrf.mxu0
    %v152 = vadd.f32 %v135, %v151
    %v153 = vpop.f32.mrf.mxu0
    %154 = vdwg.mxu0
    %155 = vmatpush.bf16.xpose.msra.mxu0 0
    %156 = vmatpush.bf16.xpose.msra.mxu0 0
    %157 = vmatpush.bf16.xpose.msra.mxu0 0
    %158 = vmatpush.bf16.xpose.msra.mxu0 0
    %159 = vmatpush.bf16.xpose.msra.mxu0 0
    %160 = vmatpush.bf16.xpose.msra.mxu0 0
    %161 = vmatpush.bf16.xpose.msra.mxu0 0
    %162 = vmatpush.bf16.xpose.msra.mxu0 %v133
    %163 = vmatmul.bf16.gmra.mxu0 %v139
    %v164 = vpop.f32.mrf.mxu0
    %v165 = vadd.f32 %v152, %v164
    %v166 = vpop.f32.mrf.mxu0
    %167 = vdwg.mxu0
    %vm168 = vcmask 122880
    %169 = vst.msk [vmem:[#allocation8] sm:$0x1] %vm168, %v165
    %v170 = vunpack.c.l.bf16 %v58
    %v171 = vunpack.c.l.bf16 %v59
    %v172 = vmul.f32 %v170, %v170
    %v173 = vmul.f32 %v171, %v171
    %v174 = vsel %vm95, %v172, 0.0
    %175 = vadd.xlane.f32.xlu0 %v174
    %v176 = vpop.xlane.xlu0 %175
    %v177 = vsel %vm95, %v173, 0.0
    %178 = vadd.xlane.f32.xlu0 %v177
    %v179 = vpop.xlane.xlu0 %178
    %v180 = vmax.f32 %v176, 1e-16
    %v181 = vmax.f32 %v179, 1e-16
    %v182 = vrsqrt.pop %v180
    %v183 = vmul.f32 %v182, %v180
    %v184 = vmul.f32 %v183, %v182
    %v185 = vmul.f32 0.5, %v184
    %v186 = vsub.f32 1.5, %v185
    %v187 = vmul.f32 %v182, %v186
    %vm188 = vweird.f32 %v180
    %vm189 = vweird.f32 %v182
    %vm190 = vmor %vm188, %vm189
    %v191 = vsel %vm190, %v182, %v187
    %v192 = vrsqrt.pop %v181
    %v193 = vmul.f32 %v192, %v181
    %v194 = vmul.f32 %v193, %v192
    %v195 = vmul.f32 0.5, %v194
    %v196 = vsub.f32 1.5, %v195
    %v197 = vmul.f32 %v192, %v196
    %vm198 = vweird.f32 %v181
    %vm199 = vweird.f32 %v192
    %vm200 = vmor %vm198, %vm199
    %v201 = vsel %vm200, %v192, %v197
    %v202 = vmul.f32 %v170, %v191
    %v203 = vmul.f32 %v171, %v201
    %v204 = vpack.c.bf16 %v202, %v202
    %v205 = vpack.c.bf16 %v203, %v203
    %vm206 = vcmask 257024
    %207 = vst.msk [vmem:[#allocation9] sm:$0xf] %vm206, %v204
    %208 = vst.msk [vmem:[#allocation9 + $0x4] sm:$0xf] %vm206, %v205
    // Predicated region
    $region30: #{tpu_custom_call.1} parent=1 // pred_check
      _
    $region31: #{tpu_custom_call.1} parent=1 // pred_check_branch
      %210 = sbr.rel (0) target = $region33
    $region32: #{tpu_custom_call.1} parent=1 // pred_region
      %212 = vsyncadd [#allocation5], 0
      %s214 = sshll.u32 [#allocation8], 4
      %s215 = int_to_ptr.vmem [resolvable:$true] %s214
      %s216 = sshll.u32 %s5, 4
      %s217 = int_to_ptr.hbm [resolvable:$true] %s216
      %219 = dma.vmem_to_hbm [thread:$0]  %s215, 16, %s217, [#allocation5]
    $region33: #{tpu_custom_call.1} parent=1 // pred_fallthru
      _
    // Predicated region
    $region34: #{tpu_custom_call.1} parent=1 // pred_check
      _
    $region35: #{tpu_custom_call.1} parent=1 // pred_check_branch
      %221 = sbr.rel (0) target = $region37
    $region36: #{tpu_custom_call.1} parent=1 // pred_region
      %223 = vsyncadd [#allocation10], 0
      %s224 = sshll.u32 [#allocation9], 4
      %s225 = int_to_ptr.vmem [resolvable:$true] %s224
      %s226 = sshll.u32 %s6, 4
      %s227 = int_to_ptr.hbm [resolvable:$true] %s226
      %232 = dma.vmem_to_hbm [thread:$0]  %s225, 128, %s227, [#allocation10], 64, 64, 4
    $region37: #{tpu_custom_call.1} parent=1 // pred_fallthru
      _
    // Predicated region
    $region38: #{tpu_custom_call.1} parent=1 // pred_check
      _
    $region39: #{tpu_custom_call.1} parent=1 // pred_check_branch
      %234 = sbr.rel (0) target = $region41
    $region40: #{tpu_custom_call.1} parent=1 // pred_region
      %236 = dma.done [#allocation5], 16
    $region41: #{tpu_custom_call.1} parent=1 // pred_fallthru
      _
    // Predicated region
    $region42: #{tpu_custom_call.1} parent=1 // pred_check
      _
    $region43: #{tpu_custom_call.1} parent=1 // pred_check_branch
      %238 = sbr.rel (0) target = $region45
    $region44: #{tpu_custom_call.1} parent=1 // pred_region
      %240 = dma.done [#allocation10], 128
    $region45: #{tpu_custom_call.1} parent=1 // pred_fallthru
      _
    %241 = vsyncpa [#allocation4], 1
    %242 = vsyncpa [#allocation7], 1
    %243 = vsyncpa [#allocation5], 1
    %244 = vsyncpa [#allocation10], 1

</llo_original>
